<compile_context>
chip_gen: v7x
topology: tpu7x:2x2x1
jax: 0.10.0
libtpu: 0.0.40
codegen_flags: <defaults>
</compile_context>

<pallas_src>
import functools

import jax
import jax.numpy as jnp
from jax import lax
from jax.experimental import pallas as pl
from jax.experimental.pallas import tpu as pltpu

_LANES = 128
_SUBLANES = 8
_CHUNK = _SUBLANES * _LANES          # 1024 elements per (8, 128) vreg chunk
_SUB = 8                             # chunks per inner accumulation slab
_STEP_BYTES = 8 * 1024 * 1024        # combined HBM bytes per grid step (both operands)


def _detect_num_tensorcores():
    """Best-effort TensorCores-per-chip (2 on v7x, 1 on v5e/v6e). Defaults to 1."""
    try:
        info = pltpu.get_tpu_info()
    except Exception:
        return 1
    for attr in ("tensorcores_per_chip", "num_tensorcores", "cores_per_chip",
                 "num_cores_per_chip"):
        val = getattr(info, attr, None)
        if isinstance(val, int) and val >= 1:
            return min(int(val), 2)
    return 1


def _dice_partial_kernel(p_ref, t_ref, out_ref, *, n_chunks, tile_chunks,
                         blocks_per_core, total_blocks, last_ragged, has_dup):
    c = pl.program_id(0)                  # per-core (parallel) axis
    i = pl.program_id(1)                  # reduction axis
    blk = c * blocks_per_core + i         # un-clamped logical block index

    @pl.when(i == 0)
    def _():
        out_ref[...] = jnp.zeros_like(out_ref)

    n_full = tile_chunks // _SUB
    rem = tile_chunks % _SUB

    def slab_sums(start, size, masked):
        p = p_ref[pl.ds(start, size)].astype(jnp.float32)
        t = t_ref[pl.ds(start, size)].astype(jnp.float32)
        if masked:
            ids = (blk * tile_chunks + start
                   + lax.broadcasted_iota(jnp.int32, p.shape, 0))
            keep = ids < n_chunks
            p = jnp.where(keep, p, 0.0)
            t = jnp.where(keep, t, 0.0)
        return jnp.sum(p * t, axis=0), jnp.sum(p + t, axis=0)

    def accumulate(masked):
        inter = jnp.zeros((_SUBLANES, _LANES), jnp.float32)
        union = jnp.zeros((_SUBLANES, _LANES), jnp.float32)
        if n_full > 0:
            def body(j, carry):
                acc_i, acc_u = carry
                start = pl.multiple_of(j * _SUB, _SUB)
                di, du = slab_sums(start, _SUB, masked)
                return acc_i + di, acc_u + du
            inter, union = lax.fori_loop(0, n_full, body, (inter, union))
        if rem > 0:
            di, du = slab_sums(n_full * _SUB, rem, masked)
            inter, union = inter + di, union + du
        out_ref[0, 0] += inter
        out_ref[0, 1] += union

    if has_dup or last_ragged:
        unmasked_limit = total_blocks - (1 if last_ragged else 0)

        @pl.when(blk < unmasked_limit)
        def _():
            accumulate(masked=False)

        if last_ragged:
            @pl.when(blk == total_blocks - 1)
            def _():
                accumulate(masked=True)
        # blk >= total_blocks: duplicated clamp blocks -> skip entirely.
    else:
        accumulate(masked=False)


def _prep(x):
    x = jnp.asarray(x)
    if x.dtype == jnp.bool_:
        # Binary masks are exact in bf16 and stream at half the HBM bytes.
        x = x.astype(jnp.bfloat16)
    elif not jnp.issubdtype(x.dtype, jnp.floating):
        # Non-binary integer labels stay f32 for exactness.
        x = x.astype(jnp.float32)
    return x.reshape(-1)


def dice_loss(pred, target, eps=1.0, *, step_bytes=_STEP_BYTES, num_cores=None):
    assert pred.shape == target.shape, "Input and Target must have the same shape"

    p = _prep(pred)
    t = _prep(target)
    n = p.shape[0]

    if n == 0:
        inter = jnp.float32(0.0)
        union = jnp.float32(0.0)
        dice_coef = (2.0 * inter + eps) / (union + eps)
        return 1.0 - dice_coef

    # Minimal sum-neutral zero pad to one (8,128)-chunk boundary; all remaining
    # grid raggedness is handled by pl.when-gated in-kernel masking.
    n_pad = pl.cdiv(n, _CHUNK) * _CHUNK
    if n_pad != n:
        p = jnp.pad(p, (0, n_pad - n))
        t = jnp.pad(t, (0, n_pad - n))
    n_chunks = n_pad // _CHUNK

    # Keep combined HBM bytes per grid step ~constant across dtypes
    # (f32+f32 -> 1024 chunks/step, bf16+bf16 -> 2048 chunks/step).
    bytes_per_chunk = _CHUNK * (p.dtype.itemsize + t.dtype.itemsize)
    tile_chunks = int(max(1, min(step_bytes // bytes_per_chunk, n_chunks)))
    total_blocks = int(pl.cdiv(n_chunks, tile_chunks))

    if num_cores is None:
        num_cores = _detect_num_tensorcores()
    num_cores = int(max(1, min(int(num_cores), total_blocks)))

    p3 = p.reshape(n_chunks, _SUBLANES, _LANES)
    t3 = t.reshape(n_chunks, _SUBLANES, _LANES)

    def run(nc):
        blocks_per_core = int(pl.cdiv(total_blocks, nc))
        last_ragged = (n_chunks % tile_chunks) != 0
        has_dup = total_blocks != nc * blocks_per_core

        def in_map(c, i):
            # Clamp so tail (c, i) pairs never index past the array; the kernel
            # skips their accumulation under pl.when.
            blk = jnp.minimum(c * blocks_per_core + i, total_blocks - 1)
            return (blk, 0, 0)

        kernel = functools.partial(
            _dice_partial_kernel,
            n_chunks=n_chunks,
            tile_chunks=tile_chunks,
            blocks_per_core=blocks_per_core,
            total_blocks=total_blocks,
            last_ragged=last_ragged,
            has_dup=has_dup,
        )

        lead_sem = pltpu.CORE_PARALLEL if nc > 1 else pltpu.ARBITRARY

        return pl.pallas_call(
            kernel,
            out_shape=jax.ShapeDtypeStruct((nc, 2, _SUBLANES, _LANES), jnp.float32),
            grid_spec=pltpu.PrefetchScalarGridSpec(
                num_scalar_prefetch=0,
                grid=(nc, blocks_per_core),
                in_specs=[
                    pl.BlockSpec((tile_chunks, _SUBLANES, _LANES), in_map),
                    pl.BlockSpec((tile_chunks, _SUBLANES, _LANES), in_map),
                ],
                out_specs=pl.BlockSpec((1, 2, _SUBLANES, _LANES),
                                       lambda c, i: (c, 0, 0, 0)),
            ),
            compiler_params=pltpu.CompilerParams(
                dimension_semantics=(lead_sem, pltpu.ARBITRARY),
                vmem_limit_bytes=48 * 1024 * 1024,
            ),
        )(p3, t3)

    try:
        partials = run(num_cores)
    except Exception:
        if num_cores > 1:
            partials = run(1)   # safe single-core fallback (same result)
        else:
            raise

    # Tiny final cross-lane combine + dice formula in plain JAX.
    inter = jnp.sum(partials[:, 0])
    union = jnp.sum(partials[:, 1])
    dice_coef = (2.0 * inter + eps) / (union + eps)
    return 1.0 - dice_coef


def _dice_loss_ref(pred, target, eps=1.0):
    p = jnp.asarray(pred, jnp.float32).reshape(-1)
    t = jnp.asarray(target, jnp.float32).reshape(-1)
    inter = jnp.sum(p * t)
    union = jnp.sum(p) + jnp.sum(t)
    return 1.0 - (2.0 * inter + eps) / (union + eps)


if __name__ == "__main__":
    key = jax.random.PRNGKey(0)
    k1, k2, k3, k4, k5, k6 = jax.random.split(key, 6)

    # 1) Small NCHW f32 example consistent with a segmentation use case.
    pred = jax.nn.sigmoid(jax.random.normal(k1, (2, 4, 16, 16), jnp.float32))
    target = (jax.random.uniform(k2, (2, 4, 16, 16)) > 0.5).astype(jnp.float32)
    loss = dice_loss(pred, target, eps=1.0)
    jax.block_until_ready(loss)
    ref = _dice_loss_ref(pred, target, eps=1.0)
    assert jnp.allclose(loss, ref, rtol=1e-5, atol=1e-5), (loss, ref)

    # 2) Ragged size + bf16 pred + bool target: native-dtype DMA and bool->bf16.
    pred2 = jax.nn.sigmoid(jax.random.normal(k3, (3, 5, 7, 11))).astype(jnp.bfloat16)
    target2 = jax.random.uniform(k4, (3, 5, 7, 11)) > 0.5
    loss2 = dice_loss(pred2, target2, eps=1.0)
    jax.block_until_ready(loss2)
    ref2 = _dice_loss_ref(pred2, target2, eps=1.0)
    assert jnp.allclose(loss2, ref2, rtol=1e-4, atol=1e-4), (loss2, ref2)

    # 3) Multi-block grid with a ragged last block: a small step_bytes forces
    #    several grid steps so the pl.when-gated mask path is exercised.
    pred3 = jax.nn.sigmoid(jax.random.normal(k5, (35, 32, 32), jnp.float32))
    target3 = (jax.random.uniform(k6, (35, 32, 32)) > 0.5).astype(jnp.float32)
    loss3 = dice_loss(pred3, target3, eps=1.0, step_bytes=8 * 8192)
    jax.block_until_ready(loss3)
    ref3 = _dice_loss_ref(pred3, target3, eps=1.0)
    assert jnp.allclose(loss3, ref3, rtol=1e-5, atol=1e-5), (loss3, ref3)

    print("KERNEL_OK")
</pallas_src>

<mosaic_0001>
module attributes {stable_mosaic.version = 11 : i64} {
  func.func @_dice_partial_kernel(%arg0: i32, %arg1: i32, %arg2: memref<2x8x128xf32, #tpu.memory_space<vmem>>, %arg3: memref<2x8x128xf32, #tpu.memory_space<vmem>>, %arg4: memref<1x2x8x128xf32, #tpu.memory_space<vmem>>) attributes {dimension_semantics = [#tpu.dimension_semantics<arbitrary>, #tpu.dimension_semantics<arbitrary>], iteration_bounds = array<i64: 1, 1>, scalar_prefetch = 0 : i64, scratch_operands = 0 : i64, tpu.core_type = #tpu.core_type<tc>, window_params = [{transform_indices = @transform_0, window_bounds = array<i64: 2, 8, 128>}, {transform_indices = @transform_1, window_bounds = array<i64: 2, 8, 128>}, {transform_indices = @transform_2, window_bounds = array<i64: 1, 2, 8, 128>}]} {
    %c0_i32 = arith.constant 0 : i32
    %0 = arith.cmpi eq, %arg1, %c0_i32 : i32
    %1 = arith.extui %0 : i1 to i32
    %c0_i32_0 = arith.constant 0 : i32
    %2 = arith.cmpi ne, %1, %c0_i32_0 : i32
    scf.if %2 {
      %cst_24 = arith.constant 0.000000e+00 : f32
      %25 = vector.broadcast %cst_24 : f32 to vector<1x2x8x128xf32>
      %c0_25 = arith.constant 0 : index
      %c0_26 = arith.constant 0 : index
      %c0_27 = arith.constant 0 : index
      %c0_28 = arith.constant 0 : index
      %26 = vector.load %arg4[%c0_25, %c0_26, %c0_27, %c0_28] : memref<1x2x8x128xf32, #tpu.memory_space<vmem>>, vector<1x2x8x128xf32>
      tpu.vector_store %arg4[%c0_25, %c0_26, %c0_27, %c0_28], %25 {strides = array<i32>} : memref<1x2x8x128xf32, #tpu.memory_space<vmem>>, vector<1x2x8x128xf32>,
    } else {
    }
    %cst = arith.constant 0.000000e+00 : f32
    %3 = vector.broadcast %cst : f32 to vector<8x128xf32>
    %cst_1 = arith.constant 0.000000e+00 : f32
    %4 = vector.broadcast %cst_1 : f32 to vector<8x128xf32>
    %c0 = arith.constant 0 : index
    %c0_2 = arith.constant 0 : index
    %c0_3 = arith.constant 0 : index
    %5 = vector.load %arg2[%c0, %c0_2, %c0_3] : memref<2x8x128xf32, #tpu.memory_space<vmem>>, vector<2x8x128xf32>
    %c0_4 = arith.constant 0 : index
    %c0_5 = arith.constant 0 : index
    %c0_6 = arith.constant 0 : index
    %6 = vector.load %arg3[%c0_4, %c0_5, %c0_6] : memref<2x8x128xf32, #tpu.memory_space<vmem>>, vector<2x8x128xf32>
    %7 = arith.mulf %5, %6 : vector<2x8x128xf32>
    %cst_7 = arith.constant dense<0.000000e+00> : vector<8x128xf32>
    %8 = vector.multi_reduction <add>, %7, %cst_7 [0] : vector<2x8x128xf32> to vector<8x128xf32>
    %9 = arith.addf %5, %6 : vector<2x8x128xf32>
    %cst_8 = arith.constant dense<0.000000e+00> : vector<8x128xf32>
    %10 = vector.multi_reduction <add>, %9, %cst_8 [0] : vector<2x8x128xf32> to vector<8x128xf32>
    %11 = arith.addf %3, %8 : vector<8x128xf32>
    %12 = arith.addf %4, %10 : vector<8x128xf32>
    %c0_9 = arith.constant 0 : index
    %c0_10 = arith.constant 0 : index
    %c0_11 = arith.constant 0 : index
    %c0_12 = arith.constant 0 : index
    %13 = vector.load %arg4[%c0_9, %c0_10, %c0_11, %c0_12] : memref<1x2x8x128xf32, #tpu.memory_space<vmem>>, vector<1x1x8x128xf32>
    %14 = vector.shape_cast %13 : vector<1x1x8x128xf32> to vector<8x128xf32>
    %15 = arith.addf %14, %11 : vector<8x128xf32>
    %c0_13 = arith.constant 0 : index
    %c0_14 = arith.constant 0 : index
    %c0_15 = arith.constant 0 : index
    %c0_16 = arith.constant 0 : index
    %16 = vector.load %arg4[%c0_13, %c0_14, %c0_15, %c0_16] : memref<1x2x8x128xf32, #tpu.memory_space<vmem>>, vector<1x1x8x128xf32>
    %17 = vector.shape_cast %16 : vector<1x1x8x128xf32> to vector<8x128xf32>
    %18 = vector.shape_cast %15 : vector<8x128xf32> to vector<1x1x8x128xf32>
    tpu.vector_store %arg4[%c0_13, %c0_14, %c0_15, %c0_16], %18 {strides = array<i32>} : memref<1x2x8x128xf32, #tpu.memory_space<vmem>>, vector<1x1x8x128xf32>,
    %c0_17 = arith.constant 0 : index
    %c1 = arith.constant 1 : index
    %c0_18 = arith.constant 0 : index
    %c0_19 = arith.constant 0 : index
    %19 = vector.load %arg4[%c0_17, %c1, %c0_18, %c0_19] : memref<1x2x8x128xf32, #tpu.memory_space<vmem>>, vector<1x1x8x128xf32>
    %20 = vector.shape_cast %19 : vector<1x1x8x128xf32> to vector<8x128xf32>
    %21 = arith.addf %20, %12 : vector<8x128xf32>
    %c0_20 = arith.constant 0 : index
    %c1_21 = arith.constant 1 : index
    %c0_22 = arith.constant 0 : index
    %c0_23 = arith.constant 0 : index
    %22 = vector.load %arg4[%c0_20, %c1_21, %c0_22, %c0_23] : memref<1x2x8x128xf32, #tpu.memory_space<vmem>>, vector<1x1x8x128xf32>
    %23 = vector.shape_cast %22 : vector<1x1x8x128xf32> to vector<8x128xf32>
    %24 = vector.shape_cast %21 : vector<8x128xf32> to vector<1x1x8x128xf32>
    tpu.vector_store %arg4[%c0_20, %c1_21, %c0_22, %c0_23], %24 {strides = array<i32>} : memref<1x2x8x128xf32, #tpu.memory_space<vmem>>, vector<1x1x8x128xf32>,
    return
  }
  func.func @transform_0(%arg0: i32, %arg1: i32) -> (i32, i32, i32) {
    %c1_i32 = arith.constant 1 : i32
    %0 = arith.muli %arg0, %c1_i32 : i32
    %1 = arith.addi %0, %arg1 : i32
    %c0_i32 = arith.constant 0 : i32
    %2 = arith.minsi %1, %c0_i32 : i32
    %c0_i32_0 = arith.constant 0 : i32
    %c0_i32_1 = arith.constant 0 : i32
    %c0_i32_2 = arith.constant 0 : i32
    return %2, %c0_i32_0, %c0_i32_1 : i32, i32, i32
  }
  func.func @transform_1(%arg0: i32, %arg1: i32) -> (i32, i32, i32) {
    %c1_i32 = arith.constant 1 : i32
    %0 = arith.muli %arg0, %c1_i32 : i32
    %1 = arith.addi %0, %arg1 : i32
    %c0_i32 = arith.constant 0 : i32
    %2 = arith.minsi %1, %c0_i32 : i32
    %c0_i32_0 = arith.constant 0 : i32
    %c0_i32_1 = arith.constant 0 : i32
    %c0_i32_2 = arith.constant 0 : i32
    return %2, %c0_i32_0, %c0_i32_1 : i32, i32, i32
  }
  func.func @transform_2(%arg0: i32, %arg1: i32) -> (i32, i32, i32, i32) {
    %c0_i32 = arith.constant 0 : i32
    %c0_i32_0 = arith.constant 0 : i32
    %c0_i32_1 = arith.constant 0 : i32
    %c0_i32_2 = arith.constant 0 : i32
    return %arg0, %c0_i32, %c0_i32_0, %c0_i32_1 : i32, i32, i32, i32
  }
}

</mosaic_0001>

<llo_original>
// kernel: tpu_custom_call.1
$region0: #{tpu_custom_call.1}
  #allocation0 [shape = 'u32[]', space=smem, size = 0x4, offset = 0x4, fixed_abs, tag = 'smem constant byte address 0x4 - core index']
  #allocation1 [shape = 'u32[144,128]{1,0:T(1,128)}', space=vmem, size = 0x12000, scoped, tag = 'internal scratch']
  %s0 = inlined_call_operand.hbm [shape: f32[2,8,128], index: 0, kind: input, shape index: {}]
  %s1 = inlined_call_operand.hbm [shape: f32[2,8,128], index: 1, kind: input, shape index: {}]
  %s2 = inlined_call_operand.hbm [shape: f32[1,2,8,128], index: 2, kind: output, shape index: {}]
  %s3 = sld [smem:[#allocation0]]
  $region30: #{tpu_custom_call.1} parent=0
    _
  %s5 = ssub.s32 1, %s3
  %s6 = scalar_select 0, %s5, %s3
  $region1: #{tpu_custom_call.1} parent=0
    #allocation2 [shape = 'u8[8192]{0}', space=vmem, size = 0x2000, scoped, tag = 'input window, operand 0, single buffered']
    #allocation3 [shape = 's32[1]{0}', space=sflag, size = 0x4, scoped, tag = 'scoped memory for tpu_custom_call.1']
    #allocation4 [shape = 's32[1]{0}', space=sflag, size = 0x4, scoped, tag = 'scoped memory for tpu_custom_call.1']
    #allocation5 [shape = 'u8[8192]{0}', space=vmem, size = 0x2000, scoped, tag = 'input window, operand 1, single buffered']
    #allocation6 [shape = 's32[1]{0}', space=sflag, size = 0x4, scoped, tag = 'scoped memory for tpu_custom_call.1']
    #allocation7 [shape = 'u8[8192]{0}', space=vmem, size = 0x2000, scoped, tag = 'output window, operand 0, single buffered']
    %7 = vsyncpa [#allocation3], 0
    %8 = vsyncpa [#allocation6], 0
    %9 = vsyncpa [#allocation4], 0
    // Predicated region
    $region2: #{tpu_custom_call.1} parent=1 // pred_check
      _
    $region3: #{tpu_custom_call.1} parent=1 // pred_check_branch
      %11 = sbr.rel (0) target = $region5
    $region4: #{tpu_custom_call.1} parent=1 // pred_region
      %s12 = sadd.s32 0, 0
      %p13 = scmp.lt.s32.totalorder %s12, 0
      %s14 = scalar_select %p13, %s12, 0
      %s15 = smul.u32 2, %s14
      %s17 = ssub.s32 256, 256
      %18 = vsyncadd [#allocation3], %s17
      %s19 = smul.addr %s15, 128
      %s20 = scalar_lea.hbm %s0, %s19
      %s21 = sshll.u32 [#allocation2], 4
      %s22 = int_to_ptr.vmem [resolvable:$true] %s21
      %27 = dma.hbm_to_vmem [thread:$0]  %s20, 256, %s22, [#allocation3], 128, 128, 8
    $region5: #{tpu_custom_call.1} parent=1 // pred_fallthru
      _
    // Predicated region
    $region6: #{tpu_custom_call.1} parent=1 // pred_check
      _
    $region7: #{tpu_custom_call.1} parent=1 // pred_check_branch
      %29 = sbr.rel (0) target = $region9
    $region8: #{tpu_custom_call.1} parent=1 // pred_region
      %s30 = sadd.s32 0, 0
      %p31 = scmp.lt.s32.totalorder %s30, 0
      %s32 = scalar_select %p31, %s30, 0
      %s33 = smul.u32 2, %s32
      %s35 = ssub.s32 256, 256
      %36 = vsyncadd [#allocation6], %s35
      %s37 = smul.addr %s33, 128
      %s38 = scalar_lea.hbm %s1, %s37
      %s39 = sshll.u32 [#allocation5], 4
      %s40 = int_to_ptr.vmem [resolvable:$true] %s39
      %45 = dma.hbm_to_vmem [thread:$0]  %s38, 256, %s40, [#allocation6], 128, 128, 8
    $region9: #{tpu_custom_call.1} parent=1 // pred_fallthru
      _
    // Predicated region
    $region10: #{tpu_custom_call.1} parent=1 // pred_check
      _
    $region11: #{tpu_custom_call.1} parent=1 // pred_check_branch
      %47 = sbr.rel (0) target = $region13
    $region12: #{tpu_custom_call.1} parent=1 // pred_region
      %48 = dma.done [#allocation3], 256
    $region13: #{tpu_custom_call.1} parent=1 // pred_fallthru
      _
    // Predicated region
    $region14: #{tpu_custom_call.1} parent=1 // pred_check
      _
    $region15: #{tpu_custom_call.1} parent=1 // pred_check_branch
      %50 = sbr.rel (0) target = $region17
    $region16: #{tpu_custom_call.1} parent=1 // pred_region
      %51 = dma.done [#allocation6], 256
    $region17: #{tpu_custom_call.1} parent=1 // pred_fallthru
      _
    %s52 = sadd.s32 0, 0
    %p53 = scmp.lt.s32.totalorder %s52, 0
    %s54 = scalar_select %p53, %s52, 0
    %s55 = smul.u32 2, %s54
    %s56 = sadd.s32 0, 0
    %p57 = scmp.lt.s32.totalorder %s56, 0
    %s58 = scalar_select %p57, %s56, 0
    %s59 = smul.u32 2, %s58
    %p60 = scmp.eq.s32.totalorder 0, 0
    // Predicated region
    $region18: #{tpu_custom_call.1} parent=1 // pred_check
      %p61 = pneg %p60
    $region19: #{tpu_custom_call.1} parent=1 // pred_check_branch
      %63 = sbr.rel (%p61) target = $region21
    $region20: #{tpu_custom_call.1} parent=1 // pred_region
      %64 = vst [vmem:[#allocation7] sm:$0xff] 0.0
      %65 = vst [vmem:[#allocation7 + $0x8] sm:$0xff] 0.0
    $region21: #{tpu_custom_call.1} parent=1 // pred_fallthru
      _
    %v66 = vld [vmem:[#allocation2] sm:$0xff]
    %v67 = vld [vmem:[#allocation2 + $0x8] sm:$0xff]
    %v68 = vld [vmem:[#allocation5] sm:$0xff]
    %v69 = vld [vmem:[#allocation5 + $0x8] sm:$0xff]
    %v70 = vmul.f32 %v66, %v68
    %v71 = vmul.f32 %v67, %v69
    %v72 = vadd.f32 %v70, %v71
    %v73 = vadd.f32 %v66, %v68
    %v74 = vadd.f32 %v67, %v69
    %v75 = vadd.f32 %v73, %v74
    %v76 = vadd.f32 %v72, 0.0
    %v77 = vadd.f32 %v75, 0.0
    %v78 = vld [vmem:[#allocation7] sm:$0xff]
    %v79 = vadd.f32 %v78, %v76
    %80 = vst [vmem:[#allocation7] sm:$0xff] %v79
    %s81 = scalar_lea.vmem [#allocation7], 8
    %v82 = vld [vmem:[%s81] sm:$0xff]
    %v83 = vadd.f32 %v82, %v77
    %84 = vst [vmem:[%s81] sm:$0xff] %v83
    // Predicated region
    $region22: #{tpu_custom_call.1} parent=1 // pred_check
      _
    $region23: #{tpu_custom_call.1} parent=1 // pred_check_branch
      %86 = sbr.rel (0) target = $region25
    $region24: #{tpu_custom_call.1} parent=1 // pred_region
      %s88 = ssub.s32 256, 256
      %89 = vsyncadd [#allocation4], %s88
      %s90 = sshll.u32 [#allocation7], 4
      %s91 = int_to_ptr.vmem [resolvable:$true] %s90
      %96 = dma.vmem_to_hbm [thread:$0]  %s91, 256, %s2, [#allocation4], 128, 128, 8
    $region25: #{tpu_custom_call.1} parent=1 // pred_fallthru
      _
    // Predicated region
    $region26: #{tpu_custom_call.1} parent=1 // pred_check
      _
    $region27: #{tpu_custom_call.1} parent=1 // pred_check_branch
      %98 = sbr.rel (0) target = $region29
    $region28: #{tpu_custom_call.1} parent=1 // pred_region
      %99 = dma.done [#allocation4], 256
    $region29: #{tpu_custom_call.1} parent=1 // pred_fallthru
      _
    %100 = vsyncpa [#allocation3], 1
    %101 = vsyncpa [#allocation6], 1
    %102 = vsyncpa [#allocation4], 1

</llo_original>
